<compile_context>
chip_gen: v7x
topology: tpu7x:2x2x1
jax: 0.10.0
libtpu: 0.0.40
codegen_flags: <defaults>
</compile_context>

<pallas_src>
import jax
import jax.numpy as jnp
from jax.experimental import pallas as pl
from jax.experimental.pallas import tpu as pltpu


def _round_up(x, m):
    return ((x + m - 1) // m) * m


def _nconv_kernel(adj_t_ref, x_ref, o_ref):
    # adj_t_ref: (W, V_pad)   x_ref: (tile_m, W)   o_ref: (tile_m, V_pad)
    # One lane-dense MXU matmul per grid step; f32 accumulation.
    o_ref[...] = jnp.dot(
        x_ref[...], adj_t_ref[...], preferred_element_type=jnp.float32
    ).astype(o_ref.dtype)


def nconv(x, adj, *, tile_m=1024, compute_dtype=None):
    """x: (N, C, W, L), adj: (V, W) -> (N, C, V, L).

    tile_m:        rows of the flattened (N*C*L, W) matrix processed per grid step.
    compute_dtype: optional dtype (e.g. jnp.bfloat16) for the streamed operands;
                   accumulation stays f32 and the output keeps x's dtype.
    """
    N, C, W, L = x.shape
    V, W2 = adj.shape
    assert W == W2, "adjacency second dim must match x node dim"

    out_dtype = x.dtype
    if compute_dtype is not None:
        x = x.astype(compute_dtype)
        adj = adj.astype(compute_dtype)

    M = N * C * L
    # Lane-dense padding of the OUTPUT lane dim only (V).  The contraction dim W is
    # left unpadded: the block's last dim equals the full array dim (allowed), and the
    # MXU handles arbitrary K, so we don't inflate the streamed HBM bytes.
    V_pad = _round_up(V, 128)

    # Clamp tile_m for tiny inputs; keep it a multiple of 8 (sublane constraint).
    tile_m = _round_up(min(tile_m, _round_up(M, 8)), 8)
    M_pad = _round_up(M, tile_m)

    # (N,C,W,L) -> (N,C,L,W) -> (M, W): contraction dim W is the lane dim of the loads.
    x2d = x.transpose(0, 1, 3, 2).reshape(M, W)
    if M_pad != M:
        # At most tile_m-1 zero rows; XLA fuses this into the transpose copy.
        x2d = jnp.pad(x2d, ((0, M_pad - M), (0, 0)))

    # adj (V, W) -> adj^T (W, V), zero-padded along V only; padded V columns are sliced
    # off below.  Tiny, constant index_map -> fetched once, VMEM-resident.
    adj_t = jnp.pad(adj.T, ((0, 0), (0, V_pad - V)))

    grid = (M_pad // tile_m,)

    out2d = pl.pallas_call(
        _nconv_kernel,
        out_shape=jax.ShapeDtypeStruct((M_pad, V_pad), out_dtype),
        grid_spec=pltpu.PrefetchScalarGridSpec(
            num_scalar_prefetch=0,
            grid=grid,
            in_specs=[
                # adj^T: constant index_map -> not re-fetched across grid steps.
                pl.BlockSpec((W, V_pad), lambda i: (0, 0)),
                # Streaming tile of x rows (contiguous in HBM: block spans full width).
                pl.BlockSpec((tile_m, W), lambda i: (i, 0)),
            ],
            out_specs=pl.BlockSpec((tile_m, V_pad), lambda i: (i, 0)),
        ),
        compiler_params=pltpu.CompilerParams(
            # Single genuinely-parallel axis: shards M-tiles across v7x's 2 TCs.
            dimension_semantics=("parallel",),
            # Safe on v7x (64 MiB physical) and raises v5e's 16 MiB default.
            vmem_limit_bytes=32 * 1024 * 1024,
        ),
    )(adj_t, x2d)

    # Slice off padding and restore PyTorch NCVL layout (layout plumbing only).
    out = out2d[:M, :V].reshape(N, C, L, V).transpose(0, 1, 3, 2)
    return out


if __name__ == "__main__":
    key = jax.random.PRNGKey(0)
    kx, ka, ka2 = jax.random.split(key, 3)

    # Small shapes consistent with the module: batch=2, channels=4,
    # num_nodes W=V=16, seq length L=8.
    N, C, W, L = 2, 4, 16, 8
    V = 16

    x = jax.random.normal(kx, (N, C, W, L), dtype=jnp.float32)
    adj = jax.random.normal(ka, (V, W), dtype=jnp.float32)
    ref = jnp.einsum("ncwl,vw->ncvl", x, adj)

    # 1) f32 path, single grid step (M=64 rows fit one tile).
    out = jax.block_until_ready(nconv(x, adj))
    assert out.shape == (N, C, V, L)
    assert jnp.allclose(out, ref, atol=1e-5, rtol=1e-5)

    # 2) f32 path with a small tile to exercise a multi-step parallel grid.
    out_tiled = jax.block_until_ready(nconv(x, adj, tile_m=16))
    assert jnp.allclose(out_tiled, ref, atol=1e-5, rtol=1e-5)

    # 3) tile_m that does not divide M exercises the M-padding path (M=64 -> 72).
    out_ragged = jax.block_until_ready(nconv(x, adj, tile_m=24))
    assert jnp.allclose(out_ragged, ref, atol=1e-5, rtol=1e-5)

    # 4) Non-square adjacency (V != W) exercises the V-padding/slicing path.
    V2 = 10
    adj2 = jax.random.normal(ka2, (V2, W), dtype=jnp.float32)
    ref2 = jnp.einsum("ncwl,vw->ncvl", x, adj2)
    out2 = jax.block_until_ready(nconv(x, adj2))
    assert out2.shape == (N, C, V2, L)
    assert jnp.allclose(out2, ref2, atol=1e-5, rtol=1e-5)

    # 5) bf16 streamed operands (memory-bound kernel -> ~2x less HBM traffic),
    #    f32 accumulation; looser tolerance reflects bf16 input rounding only.
    out_bf16 = jax.block_until_ready(nconv(x, adj, compute_dtype=jnp.bfloat16))
    assert out_bf16.dtype == x.dtype
    assert jnp.allclose(out_bf16, ref, atol=5e-1, rtol=5e-2)

    print("KERNEL_OK")
</pallas_src>

<mosaic_0001>
module attributes {stable_mosaic.version = 11 : i64} {
  func.func @_nconv_kernel(%arg0: i32, %arg1: memref<16x128xf32, #tpu.memory_space<vmem>>, %arg2: memref<64x16xf32, #tpu.memory_space<vmem>>, %arg3: memref<64x128xf32, #tpu.memory_space<vmem>>) attributes {dimension_semantics = [#tpu.dimension_semantics<parallel>], iteration_bounds = array<i64: 1>, scalar_prefetch = 0 : i64, scratch_operands = 0 : i64, tpu.core_type = #tpu.core_type<tc>, window_params = [{pipeline_mode = #tpu.pipeline_mode<synchronous>, transform_indices = @transform_0, window_bounds = array<i64: 16, 128>}, {transform_indices = @transform_1, window_bounds = array<i64: 64, 16>}, {transform_indices = @transform_2, window_bounds = array<i64: 64, 128>}]} {
    %c0 = arith.constant 0 : index
    %c0_0 = arith.constant 0 : index
    %0 = vector.load %arg2[%c0, %c0_0] : memref<64x16xf32, #tpu.memory_space<vmem>>, vector<64x16xf32>
    %c0_1 = arith.constant 0 : index
    %c0_2 = arith.constant 0 : index
    %1 = vector.load %arg1[%c0_1, %c0_2] : memref<16x128xf32, #tpu.memory_space<vmem>>, vector<16x128xf32>
    %cst = arith.constant dense<0.000000e+00> : vector<64x128xf32>
    %2 = tpu.matmul %0, %1, %cst {dimension_numbers = #tpu.dot_dimension_numbers<[1], [0], [0], [1], [0, 0, 1, 1], [], []>} : vector<64x16xf32>, vector<16x128xf32>, vector<64x128xf32> -> vector<64x128xf32>
    %c0_3 = arith.constant 0 : index
    %c0_4 = arith.constant 0 : index
    %3 = vector.load %arg3[%c0_3, %c0_4] : memref<64x128xf32, #tpu.memory_space<vmem>>, vector<64x128xf32>
    tpu.vector_store %arg3[%c0_3, %c0_4], %2 {strides = array<i32>} : memref<64x128xf32, #tpu.memory_space<vmem>>, vector<64x128xf32>,
    return
  }
  func.func @transform_0(%arg0: i32) -> (i32, i32) {
    %c0_i32 = arith.constant 0 : i32
    %c0_i32_0 = arith.constant 0 : i32
    %c0_i32_1 = arith.constant 0 : i32
    return %c0_i32, %c0_i32_0 : i32, i32
  }
  func.func @transform_1(%arg0: i32) -> (i32, i32) {
    %c0_i32 = arith.constant 0 : i32
    %c0_i32_0 = arith.constant 0 : i32
    return %arg0, %c0_i32 : i32, i32
  }
  func.func @transform_2(%arg0: i32) -> (i32, i32) {
    %c0_i32 = arith.constant 0 : i32
    %c0_i32_0 = arith.constant 0 : i32
    return %arg0, %c0_i32 : i32, i32
  }
}

</mosaic_0001>

<llo_original>
// kernel: tpu_custom_call.1
$region0: #{tpu_custom_call.1}
  #allocation0 [shape = 'u32[]', space=smem, size = 0x4, offset = 0x4, fixed_abs, tag = 'smem constant byte address 0x4 - core index']
  #allocation1 [shape = 'u32[144,128]{1,0:T(1,128)}', space=vmem, size = 0x12000, scoped, tag = 'internal scratch']
  %s0 = inlined_call_operand.vmem [shape: f32[16,128], index: 0, kind: input, shape index: {}]
  %s1 = inlined_call_operand.vmem [shape: f32[64,16], index: 1, kind: input, shape index: {}]
  %s2 = inlined_call_operand.hbm [shape: f32[64,128], index: 2, kind: output, shape index: {}]
  %s3 = sld [smem:[#allocation0]]
  $region18: #{tpu_custom_call.1} parent=0
    _
  %s5 = ssub.s32 1, %s3
  %s6 = scalar_select 0, %s5, %s3
  $region1: #{tpu_custom_call.1} parent=0
    #allocation2 [shape = 'u8[32768]{0}', space=vmem, size = 0x8000, scoped, tag = 'output window, operand 0, single buffered']
    #allocation3 [shape = 's32[1]{0}', space=sflag, size = 0x4, scoped, tag = 'scoped memory for tpu_custom_call.1']
    %7 = vsyncpa [#allocation3], 0
    // Predicated region
    $region2: #{tpu_custom_call.1} parent=1 // pred_check
      _
    $region3: #{tpu_custom_call.1} parent=1 // pred_check_branch
      %9 = sbr.rel (0) target = $region5
    $region4: #{tpu_custom_call.1} parent=1 // pred_region
      _
    $region5: #{tpu_custom_call.1} parent=1 // pred_fallthru
      _
    // Predicated region
    $region6: #{tpu_custom_call.1} parent=1 // pred_check
      _
    $region7: #{tpu_custom_call.1} parent=1 // pred_check_branch
      %11 = sbr.rel (0) target = $region9
    $region8: #{tpu_custom_call.1} parent=1 // pred_region
      _
    $region9: #{tpu_custom_call.1} parent=1 // pred_fallthru
      _
    %v12 = vld [vmem:[%s1] sm:$0xff]
    %v13 = vld [vmem:[%s1 + $0x8] sm:$0xff]
    %v14 = vld [vmem:[%s1 + $0x10] sm:$0xff]
    %v15 = vld [vmem:[%s1 + $0x18] sm:$0xff]
    %v16 = vld [vmem:[%s1 + $0x20] sm:$0xff]
    %v17 = vld [vmem:[%s1 + $0x28] sm:$0xff]
    %v18 = vld [vmem:[%s1 + $0x30] sm:$0xff]
    %v19 = vld [vmem:[%s1 + $0x38] sm:$0xff]
    %v20 = vld [vmem:[%s0] sm:$0xff]
    %v21 = vld [vmem:[%s0 + $0x8] sm:$0xff]
    %vm22 = vcmask 130048
    %v24 = vsel %vm22, %v12, 0
    %v27 = vsel %vm22, %v13, 0
    %v30 = vsel %vm22, %v14, 0
    %v33 = vsel %vm22, %v15, 0
    %v36 = vsel %vm22, %v16, 0
    %v39 = vsel %vm22, %v17, 0
    %v42 = vsel %vm22, %v18, 0
    %v45 = vsel %vm22, %v19, 0
    %47 = vmatprep.subr.mxu0 0.0
    %48 = vmatpush1.msra.mxu0 %v20
    %49 = vmatprep.subr.mxu0 0.0
    %50 = vmatpush1.msra.mxu0 %v21
    %51 = vmatprep.subr.mxu0 0.0
    %52 = vmatpush1.msra.mxu0 0.0
    %53 = vmatprep.subr.mxu0 0.0
    %54 = vmatpush1.msra.mxu0 0.0
    %55 = vmatprep.subr.mxu0 0.0
    %56 = vmatpush1.msra.mxu0 0.0
    %57 = vmatprep.subr.mxu0 0.0
    %58 = vmatpush1.msra.mxu0 0.0
    %59 = vmatprep.subr.mxu0 0.0
    %60 = vmatpush1.msra.mxu0 0.0
    %61 = vmatprep.subr.mxu0 0.0
    %62 = vmatpush1.msra.mxu0 0.0
    %63 = vmatprep.subr.mxu0 0.0
    %64 = vmatpush1.msra.mxu0 0.0
    %65 = vmatprep.subr.mxu0 0.0
    %66 = vmatpush1.msra.mxu0 0.0
    %67 = vmatprep.subr.mxu0 0.0
    %68 = vmatpush1.msra.mxu0 0.0
    %69 = vmatprep.subr.mxu0 0.0
    %70 = vmatpush1.msra.mxu0 0.0
    %71 = vmatprep.subr.mxu0 0.0
    %72 = vmatpush1.msra.mxu0 0.0
    %73 = vmatprep.subr.mxu0 0.0
    %74 = vmatpush1.msra.mxu0 0.0
    %75 = vmatprep.subr.mxu0 0.0
    %76 = vmatpush1.msra.mxu0 0.0
    %77 = vmatprep.subr.mxu0 0.0
    %78 = vmatpush1.msra.mxu0 0.0
    %79 = vmatprep.subr.mxu0 0.0
    %80 = vmatpush1.msra.mxu0 0.0
    %81 = vmatprep.subr.mxu0 0.0
    %82 = vmatpush1.msra.mxu0 0.0
    %83 = vmatprep.subr.mxu0 0.0
    %84 = vmatpush1.msra.mxu0 0.0
    %85 = vmatprep.subr.mxu0 0.0
    %86 = vmatpush1.msra.mxu0 0.0
    %87 = vmatprep.subr.mxu0 0.0
    %88 = vmatpush1.msra.mxu0 0.0
    %89 = vmatprep.subr.mxu0 0.0
    %90 = vmatpush1.msra.mxu0 0.0
    %91 = vmatprep.subr.mxu0 0.0
    %92 = vmatpush1.msra.mxu0 0.0
    %93 = vmatprep.subr.mxu0 0.0
    %94 = vmatpush1.msra.mxu0 0.0
    %95 = vmatprep.subr.mxu0 0.0
    %96 = vmatpush1.msra.mxu0 0.0
    %97 = vmatprep.subr.mxu0 0.0
    %98 = vmatpush1.msra.mxu0 0.0
    %99 = vmatprep.subr.mxu0 0.0
    %100 = vmatpush1.msra.mxu0 0.0
    %101 = vmatprep.subr.mxu0 0.0
    %102 = vmatpush1.msra.mxu0 0.0
    %103 = vmatprep.subr.mxu0 0.0
    %104 = vmatpush1.msra.mxu0 0.0
    %105 = vmatprep.subr.mxu0 0.0
    %106 = vmatpush1.msra.mxu0 0.0
    %107 = vmatprep.subr.mxu0 0.0
    %108 = vmatpush1.msra.mxu0 0.0
    %109 = vmatprep.subr.mxu0 0.0
    %110 = vmatpush1.msra.mxu0 0.0
    %111 = vmatprep.mubr.f32.mxu0 0.0
    %112 = vmatmul.mubr.f32.gmra.mrb[0].mxu0 %v24
    %v113 = vpop.f32.mrb[0].mxu0
    %v114 = vadd.f32 0.0, %v113
    %v115 = vpop.f32.mrb[0].mxu0
    %116 = vmatprep.mubr.f32.mxu0 0.0
    %117 = vmatmul.mubr.f32.gmra.mrb[0].mxu0 %v27
    %v118 = vpop.f32.mrb[0].mxu0
    %v119 = vadd.f32 0.0, %v118
    %v120 = vpop.f32.mrb[0].mxu0
    %121 = vmatprep.mubr.f32.mxu0 0.0
    %122 = vmatmul.mubr.f32.gmra.mrb[0].mxu0 %v30
    %v123 = vpop.f32.mrb[0].mxu0
    %v124 = vadd.f32 0.0, %v123
    %v125 = vpop.f32.mrb[0].mxu0
    %126 = vmatprep.mubr.f32.mxu0 0.0
    %127 = vmatmul.mubr.f32.gmra.mrb[0].mxu0 %v33
    %v128 = vpop.f32.mrb[0].mxu0
    %v129 = vadd.f32 0.0, %v128
    %v130 = vpop.f32.mrb[0].mxu0
    %131 = vmatprep.mubr.f32.mxu0 0.0
    %132 = vmatmul.mubr.f32.gmra.mrb[0].mxu0 %v36
    %v133 = vpop.f32.mrb[0].mxu0
    %v134 = vadd.f32 0.0, %v133
    %v135 = vpop.f32.mrb[0].mxu0
    %136 = vmatprep.mubr.f32.mxu0 0.0
    %137 = vmatmul.mubr.f32.gmra.mrb[0].mxu0 %v39
    %v138 = vpop.f32.mrb[0].mxu0
    %v139 = vadd.f32 0.0, %v138
    %v140 = vpop.f32.mrb[0].mxu0
    %141 = vmatprep.mubr.f32.mxu0 0.0
    %142 = vmatmul.mubr.f32.gmra.mrb[0].mxu0 %v42
    %v143 = vpop.f32.mrb[0].mxu0
    %v144 = vadd.f32 0.0, %v143
    %v145 = vpop.f32.mrb[0].mxu0
    %146 = vmatprep.mubr.f32.mxu0 0.0
    %147 = vmatmul.mubr.f32.gmra.mrb[0].mxu0 %v45
    %v148 = vpop.f32.mrb[0].mxu0
    %v149 = vadd.f32 0.0, %v148
    %v150 = vpop.f32.mrb[0].mxu0
    %151 = vdwg.mxu0
    %152 = vst [vmem:[#allocation2] sm:$0xff] %v114
    %153 = vst [vmem:[#allocation2 + $0x8] sm:$0xff] %v119
    %154 = vst [vmem:[#allocation2 + $0x10] sm:$0xff] %v124
    %155 = vst [vmem:[#allocation2 + $0x18] sm:$0xff] %v129
    %156 = vst [vmem:[#allocation2 + $0x20] sm:$0xff] %v134
    %157 = vst [vmem:[#allocation2 + $0x28] sm:$0xff] %v139
    %158 = vst [vmem:[#allocation2 + $0x30] sm:$0xff] %v144
    %159 = vst [vmem:[#allocation2 + $0x38] sm:$0xff] %v149
    // Predicated region
    $region10: #{tpu_custom_call.1} parent=1 // pred_check
      _
    $region11: #{tpu_custom_call.1} parent=1 // pred_check_branch
      %161 = sbr.rel (0) target = $region13
    $region12: #{tpu_custom_call.1} parent=1 // pred_region
      %s163 = ssub.s32 1024, 1024
      %164 = vsyncadd [#allocation3], %s163
      %s165 = sshll.u32 [#allocation2], 4
      %s166 = int_to_ptr.vmem [resolvable:$true] %s165
      %171 = dma.vmem_to_hbm [thread:$0]  %s166, 1024, %s2, [#allocation3], 128, 128, 8
    $region13: #{tpu_custom_call.1} parent=1 // pred_fallthru
      _
    // Predicated region
    $region14: #{tpu_custom_call.1} parent=1 // pred_check
      _
    $region15: #{tpu_custom_call.1} parent=1 // pred_check_branch
      %173 = sbr.rel (0) target = $region17
    $region16: #{tpu_custom_call.1} parent=1 // pred_region
      %174 = dma.done [#allocation3], 1024
    $region17: #{tpu_custom_call.1} parent=1 // pred_fallthru
      _
    %175 = vsyncpa [#allocation3], 1

</llo_original>
